<compile_context>
chip_gen: v7x
topology: tpu7x:2x2x1
jax: 0.10.0
libtpu: 0.0.40
codegen_flags: <defaults>
</compile_context>

<pallas_src>
import functools

import jax
import jax.numpy as jnp
import numpy as np
from jax.experimental import pallas as pl
from jax.experimental.pallas import tpu as pltpu


# -----------------------------------------------------------------------------
# Stage 1: mod[i] = (SiLU(emb) @ W_i^T + b_i), i in [0, 6), K-tiled over D.
# -----------------------------------------------------------------------------
def _ada_emb_kernel(t_ref, w_ref, b_ref, mod_ref, acc_ref):
    k = pl.program_id(1)

    @pl.when(k == 0)
    def _():
        acc_ref[...] = jnp.zeros_like(acc_ref)

    t = t_ref[...].astype(jnp.float32)                       # [B, tk]
    silu_t = t * jax.nn.sigmoid(t)                           # SiLU in f32 (EUP)
    w = w_ref[0]                                             # [D, tk] torch layout chunk
    # Contract silu_t(dim 1) with w(dim 1): no transpose ever materialized.
    acc_ref[...] += jax.lax.dot_general(
        silu_t.astype(w.dtype), w,
        dimension_numbers=(((1,), (1,)), ((), ())),
        preferred_element_type=jnp.float32)                  # [B, D]

    @pl.when(k == pl.num_programs(1) - 1)
    def _():
        out = acc_ref[...] + b_ref[0].astype(jnp.float32)    # [B, D] + [1, D]
        mod_ref[0] = out.astype(mod_ref.dtype)


# -----------------------------------------------------------------------------
# Stage 2: x_out = LN(x, no affine) * (1 + scale_msa) + shift_msa, tiled over
# a single flattened (batch * seq-tile) grid axis.
# -----------------------------------------------------------------------------
def _ada_modulate_kernel(x_ref, shift_ref, scale_ref, o_ref, *, eps):
    x = x_ref[0].astype(jnp.float32)                         # [tn, D]
    shift = shift_ref[...].astype(jnp.float32)               # [1, D]
    scale = scale_ref[...].astype(jnp.float32)               # [1, D]

    # Single-pass moments: E[x], E[x^2]; var = E[x^2] - mean^2.
    mean = jnp.mean(x, axis=-1, keepdims=True)
    mean_sq = jnp.mean(x * x, axis=-1, keepdims=True)
    var = jnp.maximum(mean_sq - mean * mean, 0.0)
    y = (x - mean) * jax.lax.rsqrt(var + eps)                # LN, no affine
    o_ref[0] = (y * (1.0 + scale) + shift).astype(o_ref.dtype)


# -----------------------------------------------------------------------------
# Tiling / VMEM helpers (generation-aware via get_tpu_info).
# -----------------------------------------------------------------------------
def _vmem_capacity_bytes():
    try:
        return int(pltpu.get_tpu_info().vmem_capacity_bytes)
    except Exception:
        return 64 * 1024 * 1024   # conservative: v7x per-TensorCore VMEM


def _clamp_vmem(need_bytes, cap_bytes):
    need = int(need_bytes) + 2 * 1024 * 1024      # headroom for Mosaic scratch
    return int(max(4 * 1024 * 1024, min(cap_bytes, need)))


def _pick_k_tile(d, w_itemsize, budget_bytes):
    """Largest lane-aligned (mult of 128) divisor of D whose (D, tk) weight
    block fits the byte budget; full D if it already fits or isn't 128-aligned."""
    if d % 128 != 0 or d * d * w_itemsize <= budget_bytes:
        return d
    cands = [tk for tk in range(128, d + 1, 128)
             if d % tk == 0 and d * tk * w_itemsize <= budget_bytes]
    return max(cands) if cands else 128


def _pick_seq_tile(n, d, itemsize, budget_bytes):
    """Largest sublane-aligned (mult of 8) divisor of N whose (tn, D) x-tile
    fits the byte budget; full N if it already fits / nothing divides."""
    if n * d * itemsize <= budget_bytes:
        return n
    cands = [tn for tn in range(8, n + 1, 8)
             if n % tn == 0 and tn * d * itemsize <= budget_bytes]
    if cands:
        return max(cands)
    return 8 if n % 8 == 0 else n


# -----------------------------------------------------------------------------
# Wrapper
# -----------------------------------------------------------------------------
def ada_layer_norm_zero(x, emb, weight, bias, *, eps=1e-6, seq_tile=None):
    """Pallas forward of AdaLayerNormZero.

    x:      [B, N, D]
    emb:    [B, D]     (timestep embedding)
    weight: [6*D, D]   (torch nn.Linear layout — NOT transposed here; pre-cast
                        to bf16 at init time for the MXU-native / half-DMA path)
    bias:   [6*D]
    returns (x_out, gate_msa, shift_mlp, scale_mlp, gate_mlp)
    """
    B, N, D = x.shape
    assert emb.shape == (B, D)
    assert weight.shape == (6 * D, D) and bias.shape == (6 * D,)

    out_dtype = jnp.promote_types(emb.dtype, weight.dtype)   # f32 stays f32
    w3 = weight.reshape(6, D, D)      # contiguous reshape: no HBM transpose
    b3 = bias.reshape(6, 1, D)

    w_item = jnp.dtype(weight.dtype).itemsize
    emb_item = jnp.dtype(emb.dtype).itemsize
    out_item = jnp.dtype(out_dtype).itemsize
    x_item = jnp.dtype(x.dtype).itemsize

    vmem_cap = _vmem_capacity_bytes()
    block_budget = max(vmem_cap // 16, 1 * 1024 * 1024)      # ~4 MiB v7x, ~8 MiB v5e/v6e
    vmem_limit_cap = max(vmem_cap - 8 * 1024 * 1024, 8 * 1024 * 1024)

    # ---- Stage 1: streamed AdaLN projection, grid = (6 chunks, K tiles) ------
    tk = _pick_k_tile(D, w_item, block_budget)
    assert D % tk == 0
    nk = D // tk
    stage1_bytes = (
        2 * B * tk * emb_item          # emb blocks (double-buffered)
        + 2 * D * tk * w_item          # weight blocks (double-buffered)
        + 2 * D * 4                    # bias blocks
        + 2 * B * D * out_item         # output chunk blocks
        + B * D * 4                    # f32 accumulator scratch
        + D * tk * w_item              # in-kernel operand cast temporary
        + 2 * B * tk * 4               # silu f32 temporaries
    )
    mod = pl.pallas_call(
        _ada_emb_kernel,
        out_shape=jax.ShapeDtypeStruct((6, B, D), out_dtype),
        grid_spec=pltpu.PrefetchScalarGridSpec(
            num_scalar_prefetch=0,
            grid=(6, nk),
            in_specs=[
                pl.BlockSpec((B, tk), lambda i, k: (0, k)),        # emb
                pl.BlockSpec((1, D, tk), lambda i, k: (i, 0, k)),  # weight chunk
                pl.BlockSpec((1, 1, D), lambda i, k: (i, 0, 0)),   # bias chunk
            ],
            out_specs=pl.BlockSpec((1, B, D), lambda i, k: (i, 0, 0)),
            scratch_shapes=[pltpu.VMEM((B, D), jnp.float32)],
        ),
        compiler_params=pltpu.CompilerParams(
            dimension_semantics=("parallel", "arbitrary"),
            vmem_limit_bytes=_clamp_vmem(stage1_bytes, vmem_limit_cap),
        ),
    )(emb, w3, b3)

    shift_msa, scale_msa = mod[0], mod[1]
    gate_msa, shift_mlp, scale_mlp, gate_mlp = mod[2], mod[3], mod[4], mod[5]

    # ---- Stage 2: LN + modulation, flattened (B * seq-tiles) parallel grid ---
    tn = _pick_seq_tile(N, D, x_item, block_budget) if seq_tile is None else seq_tile
    assert N % tn == 0
    nt = N // tn
    stage2_bytes = (
        2 * tn * D * x_item            # x blocks (double-buffered)
        + 2 * tn * D * x_item          # output blocks (double-buffered)
        + 4 * 2 * D * 4                # shift/scale blocks
        + 4 * tn * D * 4               # f32 upcast / centered / scaled temporaries
    )
    kernel = functools.partial(_ada_modulate_kernel, eps=eps)
    x_out = pl.pallas_call(
        kernel,
        out_shape=jax.ShapeDtypeStruct((B, N, D), x.dtype),
        grid_spec=pltpu.PrefetchScalarGridSpec(
            num_scalar_prefetch=0,
            grid=(B * nt,),            # single >=2-extent parallel axis (v7x megacore)
            in_specs=[
                pl.BlockSpec((1, tn, D), lambda i: (i // nt, i % nt, 0)),  # x tile
                pl.BlockSpec((1, D), lambda i: (i // nt, 0)),              # shift_msa
                pl.BlockSpec((1, D), lambda i: (i // nt, 0)),              # scale_msa
            ],
            out_specs=pl.BlockSpec((1, tn, D), lambda i: (i // nt, i % nt, 0)),
        ),
        compiler_params=pltpu.CompilerParams(
            dimension_semantics=("parallel",),
            vmem_limit_bytes=_clamp_vmem(stage2_bytes, vmem_limit_cap),
        ),
    )(x, shift_msa, scale_msa)

    return x_out, gate_msa, shift_mlp, scale_mlp, gate_mlp


# -----------------------------------------------------------------------------
# Pure-JAX reference (mirrors the PyTorch module) for a correctness check.
# -----------------------------------------------------------------------------
def _reference(x, emb, weight, bias, eps=1e-6):
    silu = emb * jax.nn.sigmoid(emb)
    e = silu @ weight.T + bias
    D = x.shape[-1]
    shift_msa, scale_msa, gate_msa, shift_mlp, scale_mlp, gate_mlp = (
        e[:, i * D:(i + 1) * D] for i in range(6))
    mean = jnp.mean(x, axis=-1, keepdims=True)
    var = jnp.mean((x - mean) ** 2, axis=-1, keepdims=True)
    xn = (x - mean) * jax.lax.rsqrt(var + eps)
    x_out = xn * (1.0 + scale_msa[:, None]) + shift_msa[:, None]
    return x_out, gate_msa, shift_mlp, scale_mlp, gate_mlp


if __name__ == "__main__":
    B, N, D = 2, 8, 32
    key = jax.random.PRNGKey(0)
    kx, ke, kw, kb = jax.random.split(key, 4)
    x = jax.random.normal(kx, (B, N, D), dtype=jnp.float32)
    t_emb = jax.random.normal(ke, (B, D), dtype=jnp.float32)
    weight = (0.02 * jax.random.normal(kw, (6 * D, D))).astype(jnp.float32)
    bias = (0.02 * jax.random.normal(kb, (6 * D,))).astype(jnp.float32)

    refs = _reference(x, t_emb, weight, bias)

    # f32 weights: exact-path check.
    outs = jax.block_until_ready(ada_layer_norm_zero(x, t_emb, weight, bias))
    for got, want in zip(outs, refs):
        assert got.shape == want.shape
        np.testing.assert_allclose(np.asarray(got), np.asarray(want),
                                   rtol=1e-5, atol=1e-5)

    # bf16 weights (recommended init-time cast -> MXU-native, half the W DMA):
    # accumulation stays f32, so only a small numeric deviation is expected.
    outs_bf16 = jax.block_until_ready(
        ada_layer_norm_zero(x, t_emb, weight.astype(jnp.bfloat16), bias))
    for got, want in zip(outs_bf16, refs):
        assert got.shape == want.shape
        np.testing.assert_allclose(np.asarray(got, dtype=np.float32),
                                   np.asarray(want), rtol=5e-2, atol=2e-2)

    print("KERNEL_OK")
</pallas_src>

<mosaic_0001>
module attributes {stable_mosaic.version = 11 : i64} {
  func.func @_ada_emb_kernel(%arg0: i32, %arg1: i32, %arg2: memref<2x32xf32, #tpu.memory_space<vmem>>, %arg3: memref<1x32x32xf32, #tpu.memory_space<vmem>>, %arg4: memref<1x1x32xf32, #tpu.memory_space<vmem>>, %arg5: memref<1x2x32xf32, #tpu.memory_space<vmem>>, %arg6: memref<2x32xf32, #tpu.memory_space<vmem>>) attributes {dimension_semantics = [#tpu.dimension_semantics<parallel>, #tpu.dimension_semantics<arbitrary>], iteration_bounds = array<i64: 6, 1>, scalar_prefetch = 0 : i64, scratch_operands = 1 : i64, tpu.core_type = #tpu.core_type<tc>, window_params = [{transform_indices = @transform_0, window_bounds = array<i64: 2, 32>}, {transform_indices = @transform_1, window_bounds = array<i64: 1, 32, 32>}, {transform_indices = @transform_2, window_bounds = array<i64: 1, 1, 32>}, {transform_indices = @transform_3, window_bounds = array<i64: 1, 2, 32>}]} {
    %c0_i32 = arith.constant 0 : i32
    %0 = arith.cmpi eq, %arg1, %c0_i32 : i32
    %1 = arith.extui %0 : i1 to i32
    %c0_i32_0 = arith.constant 0 : i32
    %2 = arith.cmpi ne, %1, %c0_i32_0 : i32
    scf.if %2 {
      %cst_12 = arith.constant 0.000000e+00 : f32
      %19 = vector.broadcast %cst_12 : f32 to vector<2x32xf32>
      %c0_13 = arith.constant 0 : index
      %c0_14 = arith.constant 0 : index
      %20 = vector.load %arg6[%c0_13, %c0_14] : memref<2x32xf32, #tpu.memory_space<vmem>>, vector<2x32xf32>
      tpu.vector_store %arg6[%c0_13, %c0_14], %19 {strides = array<i32>} : memref<2x32xf32, #tpu.memory_space<vmem>>, vector<2x32xf32>,
    } else {
    }
    %c0 = arith.constant 0 : index
    %c0_1 = arith.constant 0 : index
    %3 = vector.load %arg2[%c0, %c0_1] : memref<2x32xf32, #tpu.memory_space<vmem>>, vector<2x32xf32>
    %4 = arith.negf %3 : vector<2x32xf32>
    %5 = math.exp %4 : vector<2x32xf32>
    %cst = arith.constant 1.000000e+00 : f32
    %6 = vector.broadcast %cst : f32 to vector<2x32xf32>
    %7 = arith.addf %6, %5 : vector<2x32xf32>
    %8 = arith.divf %6, %7 : vector<2x32xf32>
    %9 = arith.mulf %3, %8 : vector<2x32xf32>
    %c0_2 = arith.constant 0 : index
    %c0_3 = arith.constant 0 : index
    %c0_4 = arith.constant 0 : index
    %10 = vector.load %arg3[%c0_2, %c0_3, %c0_4] : memref<1x32x32xf32, #tpu.memory_space<vmem>>, vector<1x32x32xf32>
    %11 = vector.shape_cast %10 : vector<1x32x32xf32> to vector<32x32xf32>
    %c0_5 = arith.constant 0 : index
    %c0_6 = arith.constant 0 : index
    %12 = vector.load %arg6[%c0_5, %c0_6] : memref<2x32xf32, #tpu.memory_space<vmem>>, vector<2x32xf32>
    %cst_7 = arith.constant dense<0.000000e+00> : vector<2x32xf32>
    %13 = tpu.matmul %9, %11, %cst_7 {dimension_numbers = #tpu.dot_dimension_numbers<[1], [1], [0], [0], [0, 0, 1, 0], [], []>} : vector<2x32xf32>, vector<32x32xf32>, vector<2x32xf32> -> vector<2x32xf32>
    %14 = arith.addf %12, %13 : vector<2x32xf32>
    %c0_8 = arith.constant 0 : index
    %c0_9 = arith.constant 0 : index
    %15 = vector.load %arg6[%c0_8, %c0_9] : memref<2x32xf32, #tpu.memory_space<vmem>>, vector<2x32xf32>
    tpu.vector_store %arg6[%c0_8, %c0_9], %14 {strides = array<i32>} : memref<2x32xf32, #tpu.memory_space<vmem>>, vector<2x32xf32>,
    %c0_i32_10 = arith.constant 0 : i32
    %16 = arith.cmpi eq, %arg1, %c0_i32_10 : i32
    %17 = arith.extui %16 : i1 to i32
    %c0_i32_11 = arith.constant 0 : i32
    %18 = arith.cmpi ne, %17, %c0_i32_11 : i32
    scf.if %18 {
      %c0_12 = arith.constant 0 : index
      %c0_13 = arith.constant 0 : index
      %19 = vector.load %arg6[%c0_12, %c0_13] : memref<2x32xf32, #tpu.memory_space<vmem>>, vector<2x32xf32>
      %c0_14 = arith.constant 0 : index
      %c0_15 = arith.constant 0 : index
      %c0_16 = arith.constant 0 : index
      %20 = vector.load %arg4[%c0_14, %c0_15, %c0_16] : memref<1x1x32xf32, #tpu.memory_space<vmem>>, vector<1x1x32xf32>
      %21 = vector.shape_cast %20 : vector<1x1x32xf32> to vector<1x32xf32>
      %22 = vector.broadcast %21 : vector<1x32xf32> to vector<2x32xf32>
      %23 = arith.addf %19, %22 : vector<2x32xf32>
      %c0_17 = arith.constant 0 : index
      %c0_18 = arith.constant 0 : index
      %c0_19 = arith.constant 0 : index
      %24 = vector.load %arg5[%c0_17, %c0_18, %c0_19] : memref<1x2x32xf32, #tpu.memory_space<vmem>>, vector<1x2x32xf32>
      %25 = vector.shape_cast %24 : vector<1x2x32xf32> to vector<2x32xf32>
      %26 = vector.shape_cast %23 : vector<2x32xf32> to vector<1x2x32xf32>
      tpu.vector_store %arg5[%c0_17, %c0_18, %c0_19], %26 {strides = array<i32>} : memref<1x2x32xf32, #tpu.memory_space<vmem>>, vector<1x2x32xf32>,
    } else {
    }
    return
  }
  func.func @transform_0(%arg0: i32, %arg1: i32) -> (i32, i32) {
    %c0_i32 = arith.constant 0 : i32
    %c0_i32_0 = arith.constant 0 : i32
    return %c0_i32, %arg1 : i32, i32
  }
  func.func @transform_1(%arg0: i32, %arg1: i32) -> (i32, i32, i32) {
    %c0_i32 = arith.constant 0 : i32
    %c0_i32_0 = arith.constant 0 : i32
    return %arg0, %c0_i32, %arg1 : i32, i32, i32
  }
  func.func @transform_2(%arg0: i32, %arg1: i32) -> (i32, i32, i32) {
    %c0_i32 = arith.constant 0 : i32
    %c0_i32_0 = arith.constant 0 : i32
    %c0_i32_1 = arith.constant 0 : i32
    return %arg0, %c0_i32, %c0_i32_0 : i32, i32, i32
  }
  func.func @transform_3(%arg0: i32, %arg1: i32) -> (i32, i32, i32) {
    %c0_i32 = arith.constant 0 : i32
    %c0_i32_0 = arith.constant 0 : i32
    %c0_i32_1 = arith.constant 0 : i32
    return %arg0, %c0_i32, %c0_i32_0 : i32, i32, i32
  }
}

</mosaic_0001>

<llo_original>
// kernel: tpu_custom_call.1
$region0: #{tpu_custom_call.1}
  #allocation0 [shape = 'u32[]', space=smem, size = 0x4, offset = 0x4, fixed_abs, tag = 'smem constant byte address 0x4 - core index']
  #allocation1 [shape = 'u32[144,128]{1,0:T(1,128)}', space=vmem, size = 0x12000, scoped, tag = 'internal scratch']
  #allocation2 [shape = 'f32[2,32]{1,0:T(2,128)}', space=vmem, size = 0x400, scoped, tag = 'scratch operand']
  %s0 = inlined_call_operand.hbm [shape: f32[2,32], index: 0, kind: input, shape index: {}]
  %s1 = inlined_call_operand.hbm [shape: f32[6,32,32], index: 1, kind: input, shape index: {}]
  %s2 = inlined_call_operand.vmem [shape: f32[6,1,32], index: 2, kind: input, shape index: {}]
  %s3 = inlined_call_operand.hbm [shape: f32[6,2,32], index: 3, kind: output, shape index: {}]
  %s4 = sld [smem:[#allocation0]]
  $region61: #{tpu_custom_call.1} parent=0
    _
  %s6 = ssub.s32 1, %s4
  %s7 = scalar_select 0, %s6, %s4
  $region1: #{tpu_custom_call.1} parent=0
    #allocation3 [shape = 'u8[1024]{0}', space=vmem, size = 0x400, scoped, tag = 'input window, operand 0, single buffered']
    #allocation4 [shape = 's32[2]{0}', space=sflag, size = 0x8, scoped, tag = 'scoped memory for tpu_custom_call.1']
    #allocation5 [shape = 's32[2]{0}', space=sflag, size = 0x8, scoped, tag = 'scoped memory for tpu_custom_call.1']
    #allocation6 [shape = 'u8[32768]{0}', space=vmem, size = 0x8000, scoped, tag = 'input window, operand 1']
    #allocation7 [shape = 's32[2]{0}', space=sflag, size = 0x8, scoped, tag = 'scoped memory for tpu_custom_call.1']
    #allocation8 [shape = 'u8[2048]{0}', space=vmem, size = 0x800, scoped, tag = 'output window, operand 0']
    %8 = vsyncpa [#allocation4], 0
    %9 = vsyncpa [#allocation7], 0
    %s10 = scalar_lea.sflag [#allocation7], 1
    %11 = vsyncpa %s10, 0
    %12 = vsyncpa [#allocation5], 0
    %s13 = scalar_lea.sflag [#allocation5], 1
    %14 = vsyncpa %s13, 0
    loop: start=0, step=1, limit=8
    $region2: #{tpu_custom_call.1} parent=1 // loop_pre_header
      _
    $region3: #{tpu_custom_call.1} parent=1 // loop_header
      %s16 = sphi 0, %s20
      %p17 = scmp.ge.s32.totalorder %s16, 8
      %s23 = sphi 0, %s35
      %s24 = sphi 0, %s31
      %s25 = sphi 0, %s23
      %s26 = sphi 0, %s24
      %s27 = sphi 0, %s25
      %s28 = sphi 0, %s26
      %s38 = sphi 0, %s40
      %s41 = sphi 0, %s38
      %s42 = sphi 0, %s41
      %s58 = sphi 0, %s42
      %s66 = sphi 0, %s68
      %s69 = sphi 0, %s66
      %s70 = sphi 0, %s69
      %s86 = sphi 0, %s70
      %s92 = sphi 0, %s94
      %s95 = sphi 0, %s92
      %s96 = sphi 0, %s95
      %s112 = sphi 0, %s96
      %s118 = sphi 0, %s120
      %s121 = sphi 0, %s118
      %s122 = sphi 0, %s121
      %s138 = sphi 0, %s122
    $region4: #{tpu_custom_call.1} parent=1 // loop_header_branch
      %19 = sbr.rel (%p17) target = $region8
    $region5: #{tpu_custom_call.1} parent=1 // loop_body
      %s21 = ssub.s32 %s16, 1
      %s22 = ssub.s32 %s16, 2
      %s29 = sadd.s32 1, %s24
      %p30 = scmp.ge.s32.totalorder %s29, 1
      %s31 = scalar_select %p30, 0, %s29
      %s32 = sadd.s32 1, %s23
      %s33 = scalar_select %p30, %s32, %s23
      %p34 = scmp.ge.s32.totalorder %s33, 6
      %s35 = scalar_select %p34, 0, %s33
      %s36 = ssub.s32 %s24, %s31
      %p37 = scmp.eq.s32.totalorder %s36, 0
      %s39 = sadd.s32 %s38, 1
      %s40 = scalar_select %p37, %s38, %s39
      %p43 = pneg %p37
      %p44 = scmp.eq.s32.totalorder %s16, 5
      %p45 = por %p43, %p44
      %p46 = scmp.ne.s32.totalorder %s38, %s41
      %p47 = scmp.eq.s32.totalorder %s16, 0
      %p48 = por %p46, %p47
      %p49 = scmp.ne.s32.totalorder %s38, %s41
      %p50 = scmp.eq.s32.totalorder %s21, 5
      %p51 = por %p49, %p50
      %p52 = scmp.ne.s32.totalorder %s41, %s42
      %p53 = scmp.eq.s32.totalorder %s21, 0
      %p54 = por %p52, %p53
      %p55 = scmp.ne.s32.totalorder %s41, %s42
      %p56 = scmp.eq.s32.totalorder %s22, 5
      %p57 = por %p55, %p56
      %p59 = scmp.ne.s32.totalorder %s42, %s58
      %p60 = scmp.eq.s32.totalorder %s22, 0
      %p61 = por %p59, %p60
      %s62 = ssub.s32 %s23, %s35
      %s63 = ssub.s32 %s24, %s31
      %s64 = sor.u32 %s62, %s63
      %p65 = scmp.eq.s32.totalorder %s64, 0
      %s67 = sadd.s32 %s66, 1
      %s68 = scalar_select %p65, %s66, %s67
      %p71 = pneg %p65
      %p72 = scmp.eq.s32.totalorder %s16, 5
      %p73 = por %p71, %p72
      %p74 = scmp.ne.s32.totalorder %s66, %s69
      %p75 = scmp.eq.s32.totalorder %s16, 0
      %p76 = por %p74, %p75
      %p77 = scmp.ne.s32.totalorder %s66, %s69
      %p78 = scmp.eq.s32.totalorder %s21, 5
      %p79 = por %p77, %p78
      %p80 = scmp.ne.s32.totalorder %s69, %s70
      %p81 = scmp.eq.s32.totalorder %s21, 0
      %p82 = por %p80, %p81
      %p83 = scmp.ne.s32.totalorder %s69, %s70
      %p84 = scmp.eq.s32.totalorder %s22, 5
      %p85 = por %p83, %p84
      %p87 = scmp.ne.s32.totalorder %s70, %s86
      %p88 = scmp.eq.s32.totalorder %s22, 0
      %p89 = por %p87, %p88
      %s90 = ssub.s32 %s23, %s35
      %p91 = scmp.eq.s32.totalorder %s90, 0
      %s93 = sadd.s32 %s92, 1
      %s94 = scalar_select %p91, %s92, %s93
      %p97 = pneg %p91
      %p98 = scmp.eq.s32.totalorder %s16, 5
      %p99 = por %p97, %p98
      %p100 = scmp.ne.s32.totalorder %s92, %s95
      %p101 = scmp.eq.s32.totalorder %s16, 0
      %p102 = por %p100, %p101
      %p103 = scmp.ne.s32.totalorder %s92, %s95
      %p104 = scmp.eq.s32.totalorder %s21, 5
      %p105 = por %p103, %p104
      %p106 = scmp.ne.s32.totalorder %s95, %s96
      %p107 = scmp.eq.s32.totalorder %s21, 0
      %p108 = por %p106, %p107
      %p109 = scmp.ne.s32.totalorder %s95, %s96
      %p110 = scmp.eq.s32.totalorder %s22, 5
      %p111 = por %p109, %p110
      %p113 = scmp.ne.s32.totalorder %s96, %s112
      %p114 = scmp.eq.s32.totalorder %s22, 0
      %p115 = por %p113, %p114
      %s116 = ssub.s32 %s23, %s35
      %p117 = scmp.eq.s32.totalorder %s116, 0
      %s119 = sadd.s32 %s118, 1
      %s120 = scalar_select %p117, %s118, %s119
      %p123 = pneg %p117
      %p124 = scmp.eq.s32.totalorder %s16, 5
      %p125 = por %p123, %p124
      %p126 = scmp.ne.s32.totalorder %s118, %s121
      %p127 = scmp.eq.s32.totalorder %s16, 0
      %p128 = por %p126, %p127
      %p129 = scmp.ne.s32.totalorder %s118, %s121
      %p130 = scmp.eq.s32.totalorder %s21, 5
      %p131 = por %p129, %p130
      %p132 = scmp.ne.s32.totalorder %s121, %s122
      %p133 = scmp.eq.s32.totalorder %s21, 0
      %p134 = por %p132, %p133
      %p135 = scmp.ne.s32.totalorder %s121, %s122
      %p136 = scmp.eq.s32.totalorder %s22, 5
      %p137 = por %p135, %p136
      %p139 = scmp.ne.s32.totalorder %s122, %s138
      %p140 = scmp.eq.s32.totalorder %s22, 0
      %p141 = por %p139, %p140
      %p142 = scmp.le.s32.totalorder 1, %s16
      %p143 = scmp.lt.s32.totalorder %s16, 7
      %p144 = pnand %p142, %p143
      %p145 = pneg %p144
      // Predicated region
      $region9: #{tpu_custom_call.1} parent=5 // pred_check
        _
      $region10: #{tpu_custom_call.1} parent=5 // pred_check_branch
        %147 = sbr.rel (%p144) target = $region12
      $region11: #{tpu_custom_call.1} parent=5 // pred_region
        %s148 = ssub.s32 %s16, 1
        // Predicated region
        $region13: #{tpu_custom_call.1} parent=11 // pred_check
          %p149 = pneg %p54
        $region14: #{tpu_custom_call.1} parent=11 // pred_check_branch
          %151 = sbr.rel (%p149) target = $region16
        $region15: #{tpu_custom_call.1} parent=11 // pred_region
          %s153 = ssub.s32 32, 32
          %154 = vsyncadd [#allocation4], %s153
          %s155 = smul.addr %s26, 32
          %s156 = scalar_lea.hbm %s0, %s155
          %s158 = sshll.u32 [#allocation3], 4
          %s159 = int_to_ptr.vmem [resolvable:$true] %s158
          %161 = dma.hbm_to_vmem [thread:$0]  %s156, 32, %s159, [#allocation4]
        $region16: #{tpu_custom_call.1} parent=11 // pred_fallthru
          _
      $region12: #{tpu_custom_call.1} parent=5 // pred_fallthru
        _
      %p162 = scmp.lt.s32.totalorder %s16, 6
      // Predicated region
      $region17: #{tpu_custom_call.1} parent=5 // pred_check
        %p163 = pneg %p162
      $region18: #{tpu_custom_call.1} parent=5 // pred_check_branch
        %165 = sbr.rel (%p163) target = $region20
      $region19: #{tpu_custom_call.1} parent=5 // pred_region
        // Predicated region
        $region21: #{tpu_custom_call.1} parent=19 // pred_check
          %p166 = pneg %p76
        $region22: #{tpu_custom_call.1} parent=19 // pred_check_branch
          %168 = sbr.rel (%p166) target = $region24
        $region23: #{tpu_custom_call.1} parent=19 // pred_region
          %s169 = sand.u32 %s66, 1
          %s170 = scalar_lea.sflag [#allocation7], %s169
          %s171 = sand.u32 %s66, 1
          %s172 = smul.addr %s171, 32
          %s173 = scalar_lea.vmem [#allocation6], %s172
          %s175 = ssub.s32 512, 512
          %176 = vsyncadd %s170, %s175
          %s177 = smul.addr %s23, 4
          %s178 = sadd.s32 %s24, %s177
          %s179 = smul.addr %s178, 128
          %s180 = scalar_lea.hbm %s1, %s179
          %s181 = sshll.u32 %s173, 4
          %s182 = int_to_ptr.vmem [resolvable:$true] %s181
          %187 = dma.hbm_to_vmem [thread:$0]  %s180, 512, %s182, %s170, 128, 128, 8
        $region24: #{tpu_custom_call.1} parent=19 // pred_fallthru
          _
        // Predicated region
        $region25: #{tpu_custom_call.1} parent=19 // pred_check
          %p188 = pneg %p102
        $region26: #{tpu_custom_call.1} parent=19 // pred_check_branch
          %190 = sbr.rel (%p188) target = $region28
        $region27: #{tpu_custom_call.1} parent=19 // pred_region
          %p191 = scmp.lt.s32.totalorder %s23, 5
          %s192 = scalar_select %p191, %s23, 5
          %s193 = scalar_lea.vmem %s2, %s192
        $region28: #{tpu_custom_call.1} parent=19 // pred_fallthru
          _
      $region20: #{tpu_custom_call.1} parent=5 // pred_fallthru
        _
      %p194 = scmp.le.s32.totalorder 1, %s16
      %p195 = scmp.lt.s32.totalorder %s16, 7
      %p196 = pnand %p194, %p195
      %p197 = pneg %p196
      // Predicated region
      $region29: #{tpu_custom_call.1} parent=5 // pred_check
        _
      $region30: #{tpu_custom_call.1} parent=5 // pred_check_branch
        %199 = sbr.rel (%p196) target = $region32
      $region31: #{tpu_custom_call.1} parent=5 // pred_region
        %s200 = ssub.s32 %s16, 1
        // Predicated region
        $region33: #{tpu_custom_call.1} parent=31 // pred_check
          %p201 = pneg %p54
        $region34: #{tpu_custom_call.1} parent=31 // pred_check_branch
          %203 = sbr.rel (%p201) target = $region36
        $region35: #{tpu_custom_call.1} parent=31 // pred_region
          %204 = dma.done [#allocation4], 32
        $region36: #{tpu_custom_call.1} parent=31 // pred_fallthru
          _
        %s205 = sand.u32 %s69, 1
        %s206 = scalar_lea.sflag [#allocation7], %s205
        %s207 = sand.u32 %s69, 1
        %s208 = smul.addr %s207, 32
        %s209 = scalar_lea.vmem [#allocation6], %s208
        // Predicated region
        $region37: #{tpu_custom_call.1} parent=31 // pred_check
          %p210 = pneg %p82
        $region38: #{tpu_custom_call.1} parent=31 // pred_check_branch
          %212 = sbr.rel (%p210) target = $region40
        $region39: #{tpu_custom_call.1} parent=31 // pred_region
          %213 = dma.done %s206, 512
        $region40: #{tpu_custom_call.1} parent=31 // pred_fallthru
          _
        %p214 = pneg %p54
        %p215 = pneg %p51
        %s216 = sand.u32 %s69, 1
        %s217 = scalar_lea.sflag [#allocation7], %s216
        %s218 = sand.u32 %s69, 1
        %s219 = smul.addr %s218, 32
        %s220 = scalar_lea.vmem [#allocation6], %s219
        %p221 = pneg %p82
        %p222 = pneg %p79
        %p223 = scmp.lt.s32.totalorder %s25, 5
        %s224 = scalar_select %p223, %s25, 5
        %s225 = scalar_lea.vmem %s2, %s224
        %p226 = pneg %p108
        %p227 = pneg %p105
        %p228 = pneg %p134
        %p229 = pneg %p131
        %s230 = sand.u32 %s121, 1
        %s231 = scalar_lea.sflag [#allocation5], %s230
        %s232 = sand.u32 %s121, 1
        %s233 = smul.addr %s232, 2
        %s234 = scalar_lea.vmem [#allocation8], %s233
        %p235 = scmp.lt.s32.totalorder %s25, 5
        %s236 = scalar_select %p235, %s25, 5
        %s237 = scalar_lea.vmem %s2, %s236
        %p238 = scmp.eq.s32.totalorder %s26, 0
        // Predicated region
        $region41: #{tpu_custom_call.1} parent=31 // pred_check
          %p239 = pneg %p238
        $region42: #{tpu_custom_call.1} parent=31 // pred_check_branch
          %241 = sbr.rel (%p239) target = $region44
        $region43: #{tpu_custom_call.1} parent=31 // pred_region
          %vm242 = vcmask 254976
          %243 = vst.msk [vmem:[#allocation2] sm:$0x3] %vm242, 0.0
        $region44: #{tpu_custom_call.1} parent=31 // pred_fallthru
          _
        %v244 = vld [vmem:[#allocation3] sm:$0x3]
        %v245 = vxor.u32 %v244, 2147483648
        %v246 = vmul.f32 %v245, 1.442695
        %v247 = vpow.pop %v246
        %v248 = vadd.f32 %v247, 1.0
        %v249 = vrcp.pop %v248
        %v250 = vmul.f32 1.0, %v249
        %v251 = vmul.f32 %v244, %v250
        %v252 = vld [vmem:[%s209] sm:$0xff]
        %v253 = vld [vmem:[%s209 + $0x8] sm:$0xff]
        %v254 = vld [vmem:[%s209 + $0x10] sm:$0xff]
        %v255 = vld [vmem:[%s209 + $0x18] sm:$0xff]
        %v256 = vld [vmem:[#allocation2] sm:$0x3]
        %vm257 = vcmask 261120
        %v259 = vsel %vm257, %v251, 0
        %v262 = vsel %vm257, %v252, 0
        %v265 = vsel %vm257, %v253, 0
        %v268 = vsel %vm257, %v254, 0
        %v271 = vsel %vm257, %v255, 0
        %273 = vmatprep.subr.mxu0 0.0
        %274 = vmatpush1.xpose.msra.mxu0 %v262
        %275 = vmatprep.subr.mxu0 0.0
        %276 = vmatpush1.xpose.msra.mxu0 %v265
        %277 = vmatprep.subr.mxu0 0.0
        %278 = vmatpush1.xpose.msra.mxu0 %v268
        %279 = vmatprep.subr.mxu0 0.0
        %280 = vmatpush1.xpose.msra.mxu0 %v271
        %281 = vmatprep.subr.mxu0 0.0
        %282 = vmatpush1.xpose.msra.mxu0 0.0
        %283 = vmatprep.subr.mxu0 0.0
        %284 = vmatpush1.xpose.msra.mxu0 0.0
        %285 = vmatprep.subr.mxu0 0.0
        %286 = vmatpush1.xpose.msra.mxu0 0.0
        %287 = vmatprep.subr.mxu0 0.0
        %288 = vmatpush1.xpose.msra.mxu0 0.0
        %289 = vmatprep.subr.mxu0 0.0
        %290 = vmatpush1.xpose.msra.mxu0 0.0
        %291 = vmatprep.subr.mxu0 0.0
        %292 = vmatpush1.xpose.msra.mxu0 0.0
        %293 = vmatprep.subr.mxu0 0.0
        %294 = vmatpush1.xpose.msra.mxu0 0.0
        %295 = vmatprep.subr.mxu0 0.0
        %296 = vmatpush1.xpose.msra.mxu0 0.0
        %297 = vmatprep.subr.mxu0 0.0
        %298 = vmatpush1.xpose.msra.mxu0 0.0
        %299 = vmatprep.subr.mxu0 0.0
        %300 = vmatpush1.xpose.msra.mxu0 0.0
        %301 = vmatprep.subr.mxu0 0.0
        %302 = vmatpush1.xpose.msra.mxu0 0.0
        %303 = vmatprep.subr.mxu0 0.0
        %304 = vmatpush1.xpose.msra.mxu0 0.0
        %305 = vmatprep.subr.mxu0 0.0
        %306 = vmatpush1.xpose.msra.mxu0 0.0
        %307 = vmatprep.subr.mxu0 0.0
        %308 = vmatpush1.xpose.msra.mxu0 0.0
        %309 = vmatprep.subr.mxu0 0.0
        %310 = vmatpush1.xpose.msra.mxu0 0.0
        %311 = vmatprep.subr.mxu0 0.0
        %312 = vmatpush1.xpose.msra.mxu0 0.0
        %313 = vmatprep.subr.mxu0 0.0
        %314 = vmatpush1.xpose.msra.mxu0 0.0
        %315 = vmatprep.subr.mxu0 0.0
        %316 = vmatpush1.xpose.msra.mxu0 0.0
        %317 = vmatprep.subr.mxu0 0.0
        %318 = vmatpush1.xpose.msra.mxu0 0.0
        %319 = vmatprep.subr.mxu0 0.0
        %320 = vmatpush1.xpose.msra.mxu0 0.0
        %321 = vmatprep.subr.mxu0 0.0
        %322 = vmatpush1.xpose.msra.mxu0 0.0
        %323 = vmatprep.subr.mxu0 0.0
        %324 = vmatpush1.xpose.msra.mxu0 0.0
        %325 = vmatprep.subr.mxu0 0.0
        %326 = vmatpush1.xpose.msra.mxu0 0.0
        %327 = vmatprep.subr.mxu0 0.0
        %328 = vmatpush1.xpose.msra.mxu0 0.0
        %329 = vmatprep.subr.mxu0 0.0
        %330 = vmatpush1.xpose.msra.mxu0 0.0
        %331 = vmatprep.subr.mxu0 0.0
        %332 = vmatpush1.xpose.msra.mxu0 0.0
        %333 = vmatprep.subr.mxu0 0.0
        %334 = vmatpush1.xpose.msra.mxu0 0.0
        %335 = vmatprep.subr.mxu0 0.0
        %336 = vmatpush1.xpose.msra.mxu0 0.0
        %337 = vmatprep.mubr.f32.mxu0 0.0
        %338 = vmatmul.mubr.f32.gmra.mrb[0].mxu0 %v259
        %v339 = vpop.f32.mrb[0].mxu0
        %v340 = vadd.f32 0.0, %v339
        %v341 = vpop.f32.mrb[0].mxu0
        %342 = vdwg.mxu0
        %v343 = vadd.f32 %v256, %v340
        %vm344 = vcmask 254976
        %345 = vst.msk [vmem:[#allocation2] sm:$0x3] %vm344, %v343
        // Predicated region
        $region45: #{tpu_custom_call.1} parent=31 // pred_check
          %p346 = pneg %p238
        $region46: #{tpu_custom_call.1} parent=31 // pred_check_branch
          %348 = sbr.rel (%p346) target = $region48
        $region47: #{tpu_custom_call.1} parent=31 // pred_region
          %v349 = vld [vmem:[#allocation2] sm:$0x3]
          %v350 = vld [vmem:[%s237] sm:$0x1]
          %v352 = vlaneseq
          %v353 = vshrl.u32 %v352, 7
          %v354 = vsub.s32 0, %v353
          %v355 = vrot.slane %v350, %v354
          %v357 = vadd.f32 %v349, %v355
          %358 = vst.msk [vmem:[%s234] sm:$0x3] %vm344, %v357
        $region48: #{tpu_custom_call.1} parent=31 // pred_fallthru
          _
        %s359 = sand.u32 %s121, 1
        %s360 = scalar_lea.sflag [#allocation5], %s359
        %s361 = sand.u32 %s121, 1
        %s362 = smul.addr %s361, 2
        %s363 = scalar_lea.vmem [#allocation8], %s362
        // Predicated region
        $region49: #{tpu_custom_call.1} parent=31 // pred_check
          %p364 = pneg %p131
        $region50: #{tpu_custom_call.1} parent=31 // pred_check_branch
          %366 = sbr.rel (%p364) target = $region52
        $region51: #{tpu_custom_call.1} parent=31 // pred_region
          %s368 = ssub.s32 32, 32
          %369 = vsyncadd %s360, %s368
          %s370 = smul.addr %s25, 32
          %s371 = scalar_lea.hbm %s3, %s370
          %s373 = sshll.u32 %s363, 4
          %s374 = int_to_ptr.vmem [resolvable:$true] %s373
          %376 = dma.vmem_to_hbm [thread:$0]  %s374, 32, %s371, %s360
        $region52: #{tpu_custom_call.1} parent=31 // pred_fallthru
          _
      $region32: #{tpu_custom_call.1} parent=5 // pred_fallthru
        _
      %p377 = scmp.le.s32.totalorder 2, %s16
      // Predicated region
      $region53: #{tpu_custom_call.1} parent=5 // pred_check
        %p378 = pneg %p377
      $region54: #{tpu_custom_call.1} parent=5 // pred_check_branch
        %380 = sbr.rel (%p378) target = $region56
      $region55: #{tpu_custom_call.1} parent=5 // pred_region
        %s381 = ssub.s32 %s16, 2
        // Predicated region
        $region57: #{tpu_custom_call.1} parent=55 // pred_check
          %p382 = pneg %p137
        $region58: #{tpu_custom_call.1} parent=55 // pred_check_branch
          %384 = sbr.rel (%p382) target = $region60
        $region59: #{tpu_custom_call.1} parent=55 // pred_region
          %s385 = sand.u32 %s122, 1
          %s386 = scalar_lea.sflag [#allocation5], %s385
          %s387 = sand.u32 %s122, 1
          %s388 = smul.addr %s387, 2
          %s389 = scalar_lea.vmem [#allocation8], %s388
          %390 = dma.done %s386, 32
        $region60: #{tpu_custom_call.1} parent=55 // pred_fallthru
          _
      $region56: #{tpu_custom_call.1} parent=5 // pred_fallthru
        _
    $region6: #{tpu_custom_call.1} parent=1 // loop_footer
      %s20 = sadd.s32 1, %s16
    $region7: #{tpu_custom_call.1} parent=1 // loop_footer_branch
      %15 = sbr.rel target = $region3
    $region8: #{tpu_custom_call.1} parent=1 // loop_exit
      _
    %391 = vsyncpa [#allocation4], 1
    %s392 = scalar_lea.sflag [#allocation4], 1
    %393 = vsyncpa %s392, 1
    %394 = vsyncpa [#allocation7], 1
    %s395 = scalar_lea.sflag [#allocation7], 1
    %396 = vsyncpa %s395, 1
    %397 = vsyncpa [#allocation5], 1
    %s398 = scalar_lea.sflag [#allocation5], 1
    %399 = vsyncpa %s398, 1

</llo_original>
